<compile_context>
chip_gen: v7x
topology: tpu7x:2x2x1
jax: 0.10.0
libtpu: 0.0.40
codegen_flags: <defaults>
</compile_context>

<pallas_src>
import functools

import jax
import jax.numpy as jnp
from jax import lax
from jax.experimental import pallas as pl
from jax.experimental.pallas import tpu as pltpu

K = 3        # kernel_size of the two "outer" convs
PAD = 1      # their padding
HALO = 2     # composed one-sided receptive field of conv1 (k=3) + conv3 (k=3)
LANE = 128


def _round_up(v, m):
    return ((v + m - 1) // m) * m


def _vmem_limit_bytes():
    # v5e/v6e: 128 MiB physical (16/32 MiB default scoped); v7x: 64 MiB physical.
    try:
        cap = pltpu.get_tpu_info().vmem_capacity_bytes
    except Exception:
        cap = 64 * 2 ** 20
    return int(min(cap * 3 // 4, 96 * 2 ** 20))


def _make_kernel(tl, l_true, cin, cout):
    """Build the fused DoubleConv kernel for one (batch, L-tile) grid step."""
    tl2 = tl + 2            # rows of h1/h2 (one halo row each side for conv3)

    def _tap_dots(src, w_ref, rows):
        # sum_k  src[k : k+rows, :] @ w_ref[k]   (f32 accumulation on the MXU)
        acc = jnp.dot(src[0:rows, :], w_ref[0],
                      preferred_element_type=jnp.float32)
        for k in range(1, K):
            acc = acc + jnp.dot(src[k:k + rows, :], w_ref[k],
                                preferred_element_type=jnp.float32)
        return acc

    def kernel(x_ref, w1_ref, b1_ref, w2_ref, b2_ref, w3_ref, b3_ref,
               o_ref, xpad_ref):
        # Lane-widen the lean (tl+4, Cin) input tile to a 128-lane matmul
        # operand entirely in VMEM (HBM only carries the real channels).
        xpad_ref[...] = jnp.zeros_like(xpad_ref)
        xpad_ref[:, :cin] = x_ref[0, 0]

        # conv1 (k=3, pad=1): three accumulated per-tap dots -> bias -> ReLU.
        h1 = jnp.maximum(_tap_dots(xpad_ref, w1_ref, tl2) + b1_ref[...], 0.0)

        # conv2 (k=1) + ReLU.
        h2 = jnp.maximum(
            jnp.dot(h1.astype(jnp.bfloat16), w2_ref[...],
                    preferred_element_type=jnp.float32) + b2_ref[...], 0.0)

        # Zero the h2 halo rows that fall outside the true sequence: PyTorch's
        # conv3 zero-pads its *input* (h2), and bias+ReLU make those rows
        # non-zero otherwise.  One (tl2, 1) row mask, built once per step;
        # interior tile boundaries are untouched.
        row = lax.broadcasted_iota(jnp.int32, (tl2, 1), 0)
        g = pl.program_id(1) * tl + row - 1          # global sequence position
        h2b = jnp.where((g >= 0) & (g < l_true), h2, 0.0).astype(jnp.bfloat16)

        # conv3 (k=3, pad=1) + ReLU; store only the real output channels.
        h3 = jnp.maximum(_tap_dots(h2b, w3_ref, tl) + b3_ref[...], 0.0)
        o_ref[0, 0] = h3[:, :cout].astype(o_ref.dtype)

    return kernel


def _prep_k3_weight(w_oik, cin_p, cout_p):
    """Torch (O, I, K) layout -> per-tap slabs (K, I_pad, O_pad), bf16."""
    cout, cin, k = w_oik.shape
    w_kio = jnp.transpose(w_oik, (2, 1, 0))                       # (K, I, O)
    w_kio = jnp.pad(w_kio, ((0, 0), (0, cin_p - cin), (0, cout_p - cout)))
    return w_kio.astype(jnp.bfloat16)


def _prep_k1_weight(w_oik, cin_p, cout_p):
    """Torch (O, I, 1) layout -> (I_pad, O_pad), bf16."""
    cout, cin, _ = w_oik.shape
    w_io = jnp.transpose(w_oik[:, :, 0], (1, 0))                  # (I, O)
    return jnp.pad(w_io, ((0, cin_p - cin),
                          (0, cout_p - cout))).astype(jnp.bfloat16)


def _prep_bias(b, cout_p):
    return jnp.pad(b.reshape(1, -1),
                   ((0, 0), (0, cout_p - b.shape[0]))).astype(jnp.float32)


@functools.partial(jax.jit, static_argnames=("tl",))
def double_conv_pallas(x_ncl, w1, b1, w2, b2, w3, b3, *, tl=512):
    """x_ncl: (N, Cin, L) f32 (PyTorch NCL); weights in torch (O, I, K) layout.

    Returns (N, Cout, L) f32.
    """
    N, Cin, L = x_ncl.shape
    Cout = w1.shape[0]
    Cin_p = _round_up(Cin, LANE)
    Cout_p = _round_up(Cout, LANE)

    tl = min(tl, _round_up(L, 8))
    n_tiles = (L + tl - 1) // tl
    L_pad = n_tiles * tl
    tlh = tl + 2 * HALO

    # NCL -> NLC, cast to bf16, zero-pad the length axis with the halo and the
    # tile-rounding tail.  Channels stay lean (only real Cin lanes hit HBM).
    x_nlc = jnp.transpose(x_ncl, (0, 2, 1)).astype(jnp.bfloat16)
    x_padded = jnp.pad(x_nlc, ((0, 0), (HALO, L_pad - L + HALO), (0, 0)))

    # Overlapping haloed windows: (N, n_tiles, tl + 4, Cin).  The 4/tl overlap
    # duplication is negligible and keeps every grid step a plain Blocked load.
    windows = jnp.stack(
        [x_padded[:, t * tl:t * tl + tlh, :] for t in range(n_tiles)], axis=1)

    w1_p = _prep_k3_weight(w1, Cin_p, Cout_p)     # (K, Cin_p, Cout_p) bf16
    w2_p = _prep_k1_weight(w2, Cout_p, Cout_p)    # (Cout_p, Cout_p)   bf16
    w3_p = _prep_k3_weight(w3, Cout_p, Cout_p)    # (K, Cout_p, Cout_p) bf16
    b1_p = _prep_bias(b1, Cout_p)                 # (1, Cout_p) f32
    b2_p = _prep_bias(b2, Cout_p)
    b3_p = _prep_bias(b3, Cout_p)

    kernel = _make_kernel(tl, L, Cin, Cout)

    out = pl.pallas_call(
        kernel,
        out_shape=jax.ShapeDtypeStruct((N, n_tiles, tl, Cout), jnp.float32),
        grid_spec=pltpu.PrefetchScalarGridSpec(
            num_scalar_prefetch=0,
            grid=(N, n_tiles),
            in_specs=[
                pl.BlockSpec((1, 1, tlh, Cin), lambda n, t: (n, t, 0, 0)),
                pl.BlockSpec((K, Cin_p, Cout_p), lambda n, t: (0, 0, 0)),
                pl.BlockSpec((1, Cout_p), lambda n, t: (0, 0)),
                pl.BlockSpec((Cout_p, Cout_p), lambda n, t: (0, 0)),
                pl.BlockSpec((1, Cout_p), lambda n, t: (0, 0)),
                pl.BlockSpec((K, Cout_p, Cout_p), lambda n, t: (0, 0, 0)),
                pl.BlockSpec((1, Cout_p), lambda n, t: (0, 0)),
            ],
            out_specs=pl.BlockSpec((1, 1, tl, Cout), lambda n, t: (n, t, 0, 0)),
            scratch_shapes=[pltpu.VMEM((tlh, Cin_p), jnp.bfloat16)],
        ),
        compiler_params=pltpu.CompilerParams(
            dimension_semantics=("parallel", "parallel"),
            vmem_limit_bytes=_vmem_limit_bytes()),
    )(windows, w1_p, b1_p, w2_p, b2_p, w3_p, b3_p)

    # (N, n_tiles, tl, Cout) -> (N, L, Cout) -> NCL.
    out = out.reshape(N, L_pad, Cout)[:, :L, :]
    return jnp.transpose(out, (0, 2, 1))


def double_conv_reference(x_ncl, w1, b1, w2, b2, w3, b3):
    """Pure-JAX f32 reference with PyTorch Conv1d semantics (OIH weights)."""
    def conv(x, w_oik, b, pad):
        y = lax.conv_general_dilated(
            x, w_oik, window_strides=(1,), padding=[(pad, pad)],
            dimension_numbers=("NCH", "OIH", "NCH"))
        return y + b.reshape(1, -1, 1)

    h = jax.nn.relu(conv(x_ncl, w1, b1, PAD))
    h = jax.nn.relu(conv(h, w2, b2, 0))
    h = jax.nn.relu(conv(h, w3, b3, PAD))
    return h


if __name__ == "__main__":
    def run_case(N, Cin, Cout, L, tl, key):
        ks = jax.random.split(key, 7)
        x = jax.random.normal(ks[0], (N, Cin, L), dtype=jnp.float32)
        # Deterministic synthetic parameters in torch nn.Conv1d layout (O, I, K).
        w1 = jax.random.normal(ks[1], (Cout, Cin, K), dtype=jnp.float32) * 0.2
        b1 = jax.random.normal(ks[2], (Cout,), dtype=jnp.float32) * 0.1
        w2 = jax.random.normal(ks[3], (Cout, Cout, 1), dtype=jnp.float32) * 0.2
        b2 = jax.random.normal(ks[4], (Cout,), dtype=jnp.float32) * 0.1
        w3 = jax.random.normal(ks[5], (Cout, Cout, K), dtype=jnp.float32) * 0.2
        b3 = jax.random.normal(ks[6], (Cout,), dtype=jnp.float32) * 0.1

        out = double_conv_pallas(x, w1, b1, w2, b2, w3, b3, tl=tl)
        out = jax.block_until_ready(out)
        assert out.shape == (N, Cout, L), out.shape

        ref = double_conv_reference(x, w1, b1, w2, b2, w3, b3)
        ref = jax.block_until_ready(ref)

        # Kernel computes with bf16 operands / f32 accumulation -> looser tol
        # than the pure-f32 reference.
        if not jnp.allclose(out, ref, atol=5e-2, rtol=5e-2):
            max_err = float(jnp.max(jnp.abs(out - ref)))
            raise AssertionError(
                f"Pallas DoubleConv mismatch vs JAX reference (max err {max_err})")

    key = jax.random.PRNGKey(0)
    k1, k2 = jax.random.split(key)

    # Small smoke test implied by the module (Conv1d -> (N, C_in, L)); single tile.
    run_case(N=2, Cin=4, Cout=8, L=16, tl=512, key=k1)
    # Multi-tile case: exercises halo handling at interior tile boundaries and a
    # sequence length that is not a multiple of the tile.
    run_case(N=2, Cin=4, Cout=8, L=40, tl=16, key=k2)

    print("KERNEL_OK")
</pallas_src>

<mosaic_0001>
module attributes {stable_mosaic.version = 11 : i64} {
  func.func @kernel(%arg0: i32, %arg1: i32, %arg2: memref<1x1x20x4xbf16, #tpu.memory_space<vmem>>, %arg3: memref<3x128x128xbf16, #tpu.memory_space<vmem>>, %arg4: memref<1x128xf32, #tpu.memory_space<vmem>>, %arg5: memref<128x128xbf16, #tpu.memory_space<vmem>>, %arg6: memref<1x128xf32, #tpu.memory_space<vmem>>, %arg7: memref<3x128x128xbf16, #tpu.memory_space<vmem>>, %arg8: memref<1x128xf32, #tpu.memory_space<vmem>>, %arg9: memref<1x1x16x8xf32, #tpu.memory_space<vmem>>, %arg10: memref<20x128xbf16, #tpu.memory_space<vmem>>) attributes {dimension_semantics = [#tpu.dimension_semantics<parallel>, #tpu.dimension_semantics<parallel>], iteration_bounds = array<i64: 2, 1>, scalar_prefetch = 0 : i64, scratch_operands = 1 : i64, tpu.core_type = #tpu.core_type<tc>, window_params = [{transform_indices = @transform_0, window_bounds = array<i64: 1, 1, 20, 4>}, {pipeline_mode = #tpu.pipeline_mode<synchronous>, transform_indices = @transform_1, window_bounds = array<i64: 3, 128, 128>}, {pipeline_mode = #tpu.pipeline_mode<synchronous>, transform_indices = @transform_2, window_bounds = array<i64: 1, 128>}, {pipeline_mode = #tpu.pipeline_mode<synchronous>, transform_indices = @transform_3, window_bounds = array<i64: 128, 128>}, {pipeline_mode = #tpu.pipeline_mode<synchronous>, transform_indices = @transform_4, window_bounds = array<i64: 1, 128>}, {pipeline_mode = #tpu.pipeline_mode<synchronous>, transform_indices = @transform_5, window_bounds = array<i64: 3, 128, 128>}, {pipeline_mode = #tpu.pipeline_mode<synchronous>, transform_indices = @transform_6, window_bounds = array<i64: 1, 128>}, {transform_indices = @transform_7, window_bounds = array<i64: 1, 1, 16, 8>}]} {
    %cst = arith.constant 0.000000e+00 : bf16
    %0 = vector.broadcast %cst : bf16 to vector<20x128xbf16>
    %c0 = arith.constant 0 : index
    %c0_0 = arith.constant 0 : index
    %1 = vector.load %arg10[%c0, %c0_0] : memref<20x128xbf16, #tpu.memory_space<vmem>>, vector<20x128xbf16>
    tpu.vector_store %arg10[%c0, %c0_0], %0 {strides = array<i32>} : memref<20x128xbf16, #tpu.memory_space<vmem>>, vector<20x128xbf16>,
    %c0_1 = arith.constant 0 : index
    %c0_2 = arith.constant 0 : index
    %c0_3 = arith.constant 0 : index
    %c0_4 = arith.constant 0 : index
    %2 = vector.load %arg2[%c0_1, %c0_2, %c0_3, %c0_4] : memref<1x1x20x4xbf16, #tpu.memory_space<vmem>>, vector<1x1x20x4xbf16>
    %3 = vector.shape_cast %2 : vector<1x1x20x4xbf16> to vector<20x4xbf16>
    %c0_5 = arith.constant 0 : index
    %c0_6 = arith.constant 0 : index
    %4 = vector.load %arg10[%c0_5, %c0_6] : memref<20x128xbf16, #tpu.memory_space<vmem>>, vector<20x4xbf16>
    tpu.vector_store %arg10[%c0_5, %c0_6], %3 {strides = array<i32>} : memref<20x128xbf16, #tpu.memory_space<vmem>>, vector<20x4xbf16>,
    %c0_7 = arith.constant 0 : index
    %c0_8 = arith.constant 0 : index
    %5 = vector.load %arg10[%c0_7, %c0_8] : memref<20x128xbf16, #tpu.memory_space<vmem>>, vector<18x128xbf16>
    %c0_9 = arith.constant 0 : index
    %c0_10 = arith.constant 0 : index
    %c0_11 = arith.constant 0 : index
    %6 = vector.load %arg3[%c0_9, %c0_10, %c0_11] : memref<3x128x128xbf16, #tpu.memory_space<vmem>>, vector<1x128x128xbf16>
    %7 = vector.shape_cast %6 : vector<1x128x128xbf16> to vector<128x128xbf16>
    %cst_12 = arith.constant dense<0.000000e+00> : vector<18x128xf32>
    %8 = tpu.matmul %5, %7, %cst_12 {dimension_numbers = #tpu.dot_dimension_numbers<[1], [0], [0], [1], [0, 0, 1, 1], [], []>} : vector<18x128xbf16>, vector<128x128xbf16>, vector<18x128xf32> -> vector<18x128xf32>
    %c1 = arith.constant 1 : index
    %c0_13 = arith.constant 0 : index
    %9 = vector.load %arg10[%c1, %c0_13] : memref<20x128xbf16, #tpu.memory_space<vmem>>, vector<18x128xbf16>
    %c1_14 = arith.constant 1 : index
    %c0_15 = arith.constant 0 : index
    %c0_16 = arith.constant 0 : index
    %10 = vector.load %arg3[%c1_14, %c0_15, %c0_16] : memref<3x128x128xbf16, #tpu.memory_space<vmem>>, vector<1x128x128xbf16>
    %11 = vector.shape_cast %10 : vector<1x128x128xbf16> to vector<128x128xbf16>
    %cst_17 = arith.constant dense<0.000000e+00> : vector<18x128xf32>
    %12 = tpu.matmul %9, %11, %cst_17 {dimension_numbers = #tpu.dot_dimension_numbers<[1], [0], [0], [1], [0, 0, 1, 1], [], []>} : vector<18x128xbf16>, vector<128x128xbf16>, vector<18x128xf32> -> vector<18x128xf32>
    %13 = arith.addf %8, %12 : vector<18x128xf32>
    %c2 = arith.constant 2 : index
    %c0_18 = arith.constant 0 : index
    %14 = vector.load %arg10[%c2, %c0_18] : memref<20x128xbf16, #tpu.memory_space<vmem>>, vector<18x128xbf16>
    %c2_19 = arith.constant 2 : index
    %c0_20 = arith.constant 0 : index
    %c0_21 = arith.constant 0 : index
    %15 = vector.load %arg3[%c2_19, %c0_20, %c0_21] : memref<3x128x128xbf16, #tpu.memory_space<vmem>>, vector<1x128x128xbf16>
    %16 = vector.shape_cast %15 : vector<1x128x128xbf16> to vector<128x128xbf16>
    %cst_22 = arith.constant dense<0.000000e+00> : vector<18x128xf32>
    %17 = tpu.matmul %14, %16, %cst_22 {dimension_numbers = #tpu.dot_dimension_numbers<[1], [0], [0], [1], [0, 0, 1, 1], [], []>} : vector<18x128xbf16>, vector<128x128xbf16>, vector<18x128xf32> -> vector<18x128xf32>
    %18 = arith.addf %13, %17 : vector<18x128xf32>
    %c0_23 = arith.constant 0 : index
    %c0_24 = arith.constant 0 : index
    %19 = vector.load %arg4[%c0_23, %c0_24] : memref<1x128xf32, #tpu.memory_space<vmem>>, vector<1x128xf32>
    %20 = vector.broadcast %19 : vector<1x128xf32> to vector<18x128xf32>
    %21 = arith.addf %18, %20 : vector<18x128xf32>
    %cst_25 = arith.constant 0.000000e+00 : f32
    %22 = vector.broadcast %cst_25 : f32 to vector<18x128xf32>
    %23 = arith.maximumf %21, %22 : vector<18x128xf32>
    %24 = arith.truncf %23 : vector<18x128xf32> to vector<18x128xbf16>
    %c0_26 = arith.constant 0 : index
    %c0_27 = arith.constant 0 : index
    %25 = vector.load %arg5[%c0_26, %c0_27] : memref<128x128xbf16, #tpu.memory_space<vmem>>, vector<128x128xbf16>
    %cst_28 = arith.constant dense<0.000000e+00> : vector<18x128xf32>
    %26 = tpu.matmul %24, %25, %cst_28 {dimension_numbers = #tpu.dot_dimension_numbers<[1], [0], [0], [1], [0, 0, 1, 1], [], []>} : vector<18x128xbf16>, vector<128x128xbf16>, vector<18x128xf32> -> vector<18x128xf32>
    %c0_29 = arith.constant 0 : index
    %c0_30 = arith.constant 0 : index
    %27 = vector.load %arg6[%c0_29, %c0_30] : memref<1x128xf32, #tpu.memory_space<vmem>>, vector<1x128xf32>
    %28 = vector.broadcast %27 : vector<1x128xf32> to vector<18x128xf32>
    %29 = arith.addf %26, %28 : vector<18x128xf32>
    %cst_31 = arith.constant 0.000000e+00 : f32
    %30 = vector.broadcast %cst_31 : f32 to vector<18x128xf32>
    %31 = arith.maximumf %29, %30 : vector<18x128xf32>
    %32 = tpu.iota {dimensions = array<i32: 0>} : vector<18x1xi32>
    %c16_i32 = arith.constant 16 : i32
    %33 = arith.muli %arg1, %c16_i32 : i32
    %34 = vector.broadcast %33 : i32 to vector<18x1xi32>
    %35 = arith.addi %34, %32 : vector<18x1xi32>
    %c1_i32 = arith.constant 1 : i32
    %36 = vector.broadcast %c1_i32 : i32 to vector<18x1xi32>
    %37 = arith.subi %35, %36 : vector<18x1xi32>
    %c0_i32 = arith.constant 0 : i32
    %38 = vector.broadcast %c0_i32 : i32 to vector<18x1xi32>
    %39 = arith.cmpi sge, %37, %38 : vector<18x1xi32>
    %c16_i32_32 = arith.constant 16 : i32
    %40 = vector.broadcast %c16_i32_32 : i32 to vector<18x1xi32>
    %41 = arith.cmpi slt, %37, %40 : vector<18x1xi32>
    %42 = arith.andi %39, %41 : vector<18x1xi1>
    %cst_33 = arith.constant 0.000000e+00 : f32
    %43 = vector.shape_cast %42 : vector<18x1xi1> to vector<18x1xi1>
    %44 = vector.broadcast %43 : vector<18x1xi1> to vector<18x128xi1>
    %45 = vector.broadcast %cst_33 : f32 to vector<18x128xf32>
    %46 = arith.select %44, %31, %45 : vector<18x128xi1>, vector<18x128xf32>
    %47 = arith.truncf %46 : vector<18x128xf32> to vector<18x128xbf16>
    %48 = vector.extract_strided_slice %47 {offsets = [0, 0], sizes = [16, 128], strides = [1, 1]} : vector<18x128xbf16> to vector<16x128xbf16>
    %c0_34 = arith.constant 0 : index
    %c0_35 = arith.constant 0 : index
    %c0_36 = arith.constant 0 : index
    %49 = vector.load %arg7[%c0_34, %c0_35, %c0_36] : memref<3x128x128xbf16, #tpu.memory_space<vmem>>, vector<1x128x128xbf16>
    %50 = vector.shape_cast %49 : vector<1x128x128xbf16> to vector<128x128xbf16>
    %cst_37 = arith.constant dense<0.000000e+00> : vector<16x128xf32>
    %51 = tpu.matmul %48, %50, %cst_37 {dimension_numbers = #tpu.dot_dimension_numbers<[1], [0], [0], [1], [0, 0, 1, 1], [], []>} : vector<16x128xbf16>, vector<128x128xbf16>, vector<16x128xf32> -> vector<16x128xf32>
    %52 = vector.extract_strided_slice %47 {offsets = [1, 0], sizes = [16, 128], strides = [1, 1]} : vector<18x128xbf16> to vector<16x128xbf16>
    %c1_38 = arith.constant 1 : index
    %c0_39 = arith.constant 0 : index
    %c0_40 = arith.constant 0 : index
    %53 = vector.load %arg7[%c1_38, %c0_39, %c0_40] : memref<3x128x128xbf16, #tpu.memory_space<vmem>>, vector<1x128x128xbf16>
    %54 = vector.shape_cast %53 : vector<1x128x128xbf16> to vector<128x128xbf16>
    %cst_41 = arith.constant dense<0.000000e+00> : vector<16x128xf32>
    %55 = tpu.matmul %52, %54, %cst_41 {dimension_numbers = #tpu.dot_dimension_numbers<[1], [0], [0], [1], [0, 0, 1, 1], [], []>} : vector<16x128xbf16>, vector<128x128xbf16>, vector<16x128xf32> -> vector<16x128xf32>
    %56 = arith.addf %51, %55 : vector<16x128xf32>
    %57 = vector.extract_strided_slice %47 {offsets = [2, 0], sizes = [16, 128], strides = [1, 1]} : vector<18x128xbf16> to vector<16x128xbf16>
    %c2_42 = arith.constant 2 : index
    %c0_43 = arith.constant 0 : index
    %c0_44 = arith.constant 0 : index
    %58 = vector.load %arg7[%c2_42, %c0_43, %c0_44] : memref<3x128x128xbf16, #tpu.memory_space<vmem>>, vector<1x128x128xbf16>
    %59 = vector.shape_cast %58 : vector<1x128x128xbf16> to vector<128x128xbf16>
    %cst_45 = arith.constant dense<0.000000e+00> : vector<16x128xf32>
    %60 = tpu.matmul %57, %59, %cst_45 {dimension_numbers = #tpu.dot_dimension_numbers<[1], [0], [0], [1], [0, 0, 1, 1], [], []>} : vector<16x128xbf16>, vector<128x128xbf16>, vector<16x128xf32> -> vector<16x128xf32>
    %61 = arith.addf %56, %60 : vector<16x128xf32>
    %c0_46 = arith.constant 0 : index
    %c0_47 = arith.constant 0 : index
    %62 = vector.load %arg8[%c0_46, %c0_47] : memref<1x128xf32, #tpu.memory_space<vmem>>, vector<1x128xf32>
    %63 = vector.broadcast %62 : vector<1x128xf32> to vector<16x128xf32>
    %64 = arith.addf %61, %63 : vector<16x128xf32>
    %cst_48 = arith.constant 0.000000e+00 : f32
    %65 = vector.broadcast %cst_48 : f32 to vector<16x128xf32>
    %66 = arith.maximumf %64, %65 : vector<16x128xf32>
    %67 = vector.extract_strided_slice %66 {offsets = [0, 0], sizes = [16, 8], strides = [1, 1]} : vector<16x128xf32> to vector<16x8xf32>
    %c0_49 = arith.constant 0 : index
    %c0_50 = arith.constant 0 : index
    %c0_51 = arith.constant 0 : index
    %c0_52 = arith.constant 0 : index
    %68 = vector.load %arg9[%c0_49, %c0_50, %c0_51, %c0_52] : memref<1x1x16x8xf32, #tpu.memory_space<vmem>>, vector<1x1x16x8xf32>
    %69 = vector.shape_cast %68 : vector<1x1x16x8xf32> to vector<16x8xf32>
    %70 = vector.shape_cast %67 : vector<16x8xf32> to vector<1x1x16x8xf32>
    tpu.vector_store %arg9[%c0_49, %c0_50, %c0_51, %c0_52], %70 {strides = array<i32>} : memref<1x1x16x8xf32, #tpu.memory_space<vmem>>, vector<1x1x16x8xf32>,
    return
  }
  func.func @transform_0(%arg0: i32, %arg1: i32) -> (i32, i32, i32, i32) {
    %c0_i32 = arith.constant 0 : i32
    %c0_i32_0 = arith.constant 0 : i32
    %c0_i32_1 = arith.constant 0 : i32
    return %arg0, %arg1, %c0_i32, %c0_i32_0 : i32, i32, i32, i32
  }
  func.func @transform_1(%arg0: i32, %arg1: i32) -> (i32, i32, i32) {
    %c0_i32 = arith.constant 0 : i32
    %c0_i32_0 = arith.constant 0 : i32
    %c0_i32_1 = arith.constant 0 : i32
    %c0_i32_2 = arith.constant 0 : i32
    return %c0_i32, %c0_i32_0, %c0_i32_1 : i32, i32, i32
  }
  func.func @transform_2(%arg0: i32, %arg1: i32) -> (i32, i32) {
    %c0_i32 = arith.constant 0 : i32
    %c0_i32_0 = arith.constant 0 : i32
    %c0_i32_1 = arith.constant 0 : i32
    return %c0_i32, %c0_i32_0 : i32, i32
  }
  func.func @transform_3(%arg0: i32, %arg1: i32) -> (i32, i32) {
    %c0_i32 = arith.constant 0 : i32
    %c0_i32_0 = arith.constant 0 : i32
    %c0_i32_1 = arith.constant 0 : i32
    return %c0_i32, %c0_i32_0 : i32, i32
  }
  func.func @transform_4(%arg0: i32, %arg1: i32) -> (i32, i32) {
    %c0_i32 = arith.constant 0 : i32
    %c0_i32_0 = arith.constant 0 : i32
    %c0_i32_1 = arith.constant 0 : i32
    return %c0_i32, %c0_i32_0 : i32, i32
  }
  func.func @transform_5(%arg0: i32, %arg1: i32) -> (i32, i32, i32) {
    %c0_i32 = arith.constant 0 : i32
    %c0_i32_0 = arith.constant 0 : i32
    %c0_i32_1 = arith.constant 0 : i32
    %c0_i32_2 = arith.constant 0 : i32
    return %c0_i32, %c0_i32_0, %c0_i32_1 : i32, i32, i32
  }
  func.func @transform_6(%arg0: i32, %arg1: i32) -> (i32, i32) {
    %c0_i32 = arith.constant 0 : i32
    %c0_i32_0 = arith.constant 0 : i32
    %c0_i32_1 = arith.constant 0 : i32
    return %c0_i32, %c0_i32_0 : i32, i32
  }
  func.func @transform_7(%arg0: i32, %arg1: i32) -> (i32, i32, i32, i32) {
    %c0_i32 = arith.constant 0 : i32
    %c0_i32_0 = arith.constant 0 : i32
    %c0_i32_1 = arith.constant 0 : i32
    return %arg0, %arg1, %c0_i32, %c0_i32_0 : i32, i32, i32, i32
  }
}

</mosaic_0001>

<llo_original>
// kernel: double_conv_pallas.1
$region0: #{double_conv_pallas.1}
  #allocation0 [shape = 'u32[]', space=smem, size = 0x4, offset = 0x4, fixed_abs, tag = 'smem constant byte address 0x4 - core index']
  #allocation1 [shape = 'u32[144,128]{1,0:T(1,128)}', space=vmem, size = 0x12000, scoped, tag = 'internal scratch']
  #allocation2 [shape = 'bf16[20,128]{1,0:T(8,128)(2,1)}', space=vmem, size = 0x1800, scoped, tag = 'scratch operand']
  %s0 = inlined_call_operand.vmem [shape: bf16[2,1,20,4], index: 0, kind: input, shape index: {}]
  %s1 = inlined_call_operand.vmem [shape: bf16[3,128,128], index: 1, kind: input, shape index: {}]
  %s2 = inlined_call_operand.vmem [shape: f32[1,128], index: 2, kind: input, shape index: {}]
  %s3 = inlined_call_operand.vmem [shape: bf16[128,128], index: 3, kind: input, shape index: {}]
  %s4 = inlined_call_operand.vmem [shape: f32[1,128], index: 4, kind: input, shape index: {}]
  %s5 = inlined_call_operand.vmem [shape: bf16[3,128,128], index: 5, kind: input, shape index: {}]
  %s6 = inlined_call_operand.vmem [shape: f32[1,128], index: 6, kind: input, shape index: {}]
  %s7 = inlined_call_operand.vmem [shape: f32[2,1,16,8], index: 7, kind: output, shape index: {}]
  %s8 = sld [smem:[#allocation0]]
  $region61: #{double_conv_pallas.1} parent=0
    _
  %s10 = ssub.s32 1, %s8
  %s11 = scalar_select 0, %s10, %s8
  loop: start=0, step=1, limit=4
  $region2: #{double_conv_pallas.1} parent=0 // loop_pre_header
    _
  $region3: #{double_conv_pallas.1} parent=0 // loop_header
    %s13 = sphi 0, %s17
    %p14 = scmp.ge.s32.totalorder %s13, 4
    %s20 = sphi 0, %s32
    %s21 = sphi 0, %s28
    %s22 = sphi 0, %s20
    %s23 = sphi 0, %s21
    %s24 = sphi 0, %s22
    %s25 = sphi 0, %s23
    %s37 = sphi 0, %s39
    %s40 = sphi 0, %s37
    %s41 = sphi 0, %s40
    %s57 = sphi 0, %s41
    %s61 = sphi 0, %s61
    %s63 = sphi 0, %s61
    %s64 = sphi 0, %s63
    %s78 = sphi 0, %s64
    %s82 = sphi 0, %s82
    %s84 = sphi 0, %s82
    %s85 = sphi 0, %s84
    %s99 = sphi 0, %s85
    %s103 = sphi 0, %s103
    %s105 = sphi 0, %s103
    %s106 = sphi 0, %s105
    %s120 = sphi 0, %s106
    %s124 = sphi 0, %s124
    %s126 = sphi 0, %s124
    %s127 = sphi 0, %s126
    %s141 = sphi 0, %s127
    %s145 = sphi 0, %s145
    %s147 = sphi 0, %s145
    %s148 = sphi 0, %s147
    %s162 = sphi 0, %s148
    %s166 = sphi 0, %s166
    %s168 = sphi 0, %s166
    %s169 = sphi 0, %s168
    %s183 = sphi 0, %s169
    %s191 = sphi 0, %s193
    %s194 = sphi 0, %s191
    %s195 = sphi 0, %s194
    %s211 = sphi 0, %s195
  $region4: #{double_conv_pallas.1} parent=0 // loop_header_branch
    %16 = sbr.rel (%p14) target = $region8
  $region5: #{double_conv_pallas.1} parent=0 // loop_body
    %s18 = ssub.s32 %s13, 1
    %s19 = ssub.s32 %s13, 2
    %s26 = sadd.s32 1, %s21
    %p27 = scmp.ge.s32.totalorder %s26, 1
    %s28 = scalar_select %p27, 0, %s26
    %s29 = sadd.s32 1, %s20
    %s30 = scalar_select %p27, %s29, %s20
    %p31 = scmp.ge.s32.totalorder %s30, 2
    %s32 = scalar_select %p31, 0, %s30
    %s33 = ssub.s32 %s20, %s32
    %s34 = ssub.s32 %s21, %s28
    %s35 = sor.u32 %s33, %s34
    %p36 = scmp.eq.s32.totalorder %s35, 0
    %s38 = sadd.s32 %s37, 1
    %s39 = scalar_select %p36, %s37, %s38
    %p42 = pneg %p36
    %p43 = scmp.eq.s32.totalorder %s13, 1
    %p44 = por %p42, %p43
    %p45 = scmp.ne.s32.totalorder %s37, %s40
    %p46 = scmp.eq.s32.totalorder %s13, 0
    %p47 = por %p45, %p46
    %p48 = scmp.ne.s32.totalorder %s37, %s40
    %p49 = scmp.eq.s32.totalorder %s18, 1
    %p50 = por %p48, %p49
    %p51 = scmp.ne.s32.totalorder %s40, %s41
    %p52 = scmp.eq.s32.totalorder %s18, 0
    %p53 = por %p51, %p52
    %p54 = scmp.ne.s32.totalorder %s40, %s41
    %p55 = scmp.eq.s32.totalorder %s19, 1
    %p56 = por %p54, %p55
    %p58 = scmp.ne.s32.totalorder %s41, %s57
    %p59 = scmp.eq.s32.totalorder %s19, 0
    %p60 = por %p58, %p59
    %s62 = sadd.s32 %s61, 1
    %p65 = scmp.eq.s32.totalorder %s13, 1
    %p66 = scmp.ne.s32.totalorder %s61, %s63
    %p67 = scmp.eq.s32.totalorder %s13, 0
    %p68 = por %p66, %p67
    %p69 = scmp.ne.s32.totalorder %s61, %s63
    %p70 = scmp.eq.s32.totalorder %s18, 1
    %p71 = por %p69, %p70
    %p72 = scmp.ne.s32.totalorder %s63, %s64
    %p73 = scmp.eq.s32.totalorder %s18, 0
    %p74 = por %p72, %p73
    %p75 = scmp.ne.s32.totalorder %s63, %s64
    %p76 = scmp.eq.s32.totalorder %s19, 1
    %p77 = por %p75, %p76
    %p79 = scmp.ne.s32.totalorder %s64, %s78
    %p80 = scmp.eq.s32.totalorder %s19, 0
    %p81 = por %p79, %p80
    %s83 = sadd.s32 %s82, 1
    %p86 = scmp.eq.s32.totalorder %s13, 1
    %p87 = scmp.ne.s32.totalorder %s82, %s84
    %p88 = scmp.eq.s32.totalorder %s13, 0
    %p89 = por %p87, %p88
    %p90 = scmp.ne.s32.totalorder %s82, %s84
    %p91 = scmp.eq.s32.totalorder %s18, 1
    %p92 = por %p90, %p91
    %p93 = scmp.ne.s32.totalorder %s84, %s85
    %p94 = scmp.eq.s32.totalorder %s18, 0
    %p95 = por %p93, %p94
    %p96 = scmp.ne.s32.totalorder %s84, %s85
    %p97 = scmp.eq.s32.totalorder %s19, 1
    %p98 = por %p96, %p97
    %p100 = scmp.ne.s32.totalorder %s85, %s99
    %p101 = scmp.eq.s32.totalorder %s19, 0
    %p102 = por %p100, %p101
    %s104 = sadd.s32 %s103, 1
    %p107 = scmp.eq.s32.totalorder %s13, 1
    %p108 = scmp.ne.s32.totalorder %s103, %s105
    %p109 = scmp.eq.s32.totalorder %s13, 0
    %p110 = por %p108, %p109
    %p111 = scmp.ne.s32.totalorder %s103, %s105
    %p112 = scmp.eq.s32.totalorder %s18, 1
    %p113 = por %p111, %p112
    %p114 = scmp.ne.s32.totalorder %s105, %s106
    %p115 = scmp.eq.s32.totalorder %s18, 0
    %p116 = por %p114, %p115
    %p117 = scmp.ne.s32.totalorder %s105, %s106
    %p118 = scmp.eq.s32.totalorder %s19, 1
    %p119 = por %p117, %p118
    %p121 = scmp.ne.s32.totalorder %s106, %s120
    %p122 = scmp.eq.s32.totalorder %s19, 0
    %p123 = por %p121, %p122
    %s125 = sadd.s32 %s124, 1
    %p128 = scmp.eq.s32.totalorder %s13, 1
    %p129 = scmp.ne.s32.totalorder %s124, %s126
    %p130 = scmp.eq.s32.totalorder %s13, 0
    %p131 = por %p129, %p130
    %p132 = scmp.ne.s32.totalorder %s124, %s126
    %p133 = scmp.eq.s32.totalorder %s18, 1
    %p134 = por %p132, %p133
    %p135 = scmp.ne.s32.totalorder %s126, %s127
    %p136 = scmp.eq.s32.totalorder %s18, 0
    %p137 = por %p135, %p136
    %p138 = scmp.ne.s32.totalorder %s126, %s127
    %p139 = scmp.eq.s32.totalorder %s19, 1
    %p140 = por %p138, %p139
    %p142 = scmp.ne.s32.totalorder %s127, %s141
    %p143 = scmp.eq.s32.totalorder %s19, 0
    %p144 = por %p142, %p143
    %s146 = sadd.s32 %s145, 1
    %p149 = scmp.eq.s32.totalorder %s13, 1
    %p150 = scmp.ne.s32.totalorder %s145, %s147
    %p151 = scmp.eq.s32.totalorder %s13, 0
    %p152 = por %p150, %p151
    %p153 = scmp.ne.s32.totalorder %s145, %s147
    %p154 = scmp.eq.s32.totalorder %s18, 1
    %p155 = por %p153, %p154
    %p156 = scmp.ne.s32.totalorder %s147, %s148
    %p157 = scmp.eq.s32.totalorder %s18, 0
    %p158 = por %p156, %p157
    %p159 = scmp.ne.s32.totalorder %s147, %s148
    %p160 = scmp.eq.s32.totalorder %s19, 1
    %p161 = por %p159, %p160
    %p163 = scmp.ne.s32.totalorder %s148, %s162
    %p164 = scmp.eq.s32.totalorder %s19, 0
    %p165 = por %p163, %p164
    %s167 = sadd.s32 %s166, 1
    %p170 = scmp.eq.s32.totalorder %s13, 1
    %p171 = scmp.ne.s32.totalorder %s166, %s168
    %p172 = scmp.eq.s32.totalorder %s13, 0
    %p173 = por %p171, %p172
    %p174 = scmp.ne.s32.totalorder %s166, %s168
    %p175 = scmp.eq.s32.totalorder %s18, 1
    %p176 = por %p174, %p175
    %p177 = scmp.ne.s32.totalorder %s168, %s169
    %p178 = scmp.eq.s32.totalorder %s18, 0
    %p179 = por %p177, %p178
    %p180 = scmp.ne.s32.totalorder %s168, %s169
    %p181 = scmp.eq.s32.totalorder %s19, 1
    %p182 = por %p180, %p181
    %p184 = scmp.ne.s32.totalorder %s169, %s183
    %p185 = scmp.eq.s32.totalorder %s19, 0
    %p186 = por %p184, %p185
    %s187 = ssub.s32 %s20, %s32
    %s188 = ssub.s32 %s21, %s28
    %s189 = sor.u32 %s187, %s188
    %p190 = scmp.eq.s32.totalorder %s189, 0
    %s192 = sadd.s32 %s191, 1
    %s193 = scalar_select %p190, %s191, %s192
    %p196 = pneg %p190
    %p197 = scmp.eq.s32.totalorder %s13, 1
    %p198 = por %p196, %p197
    %p199 = scmp.ne.s32.totalorder %s191, %s194
    %p200 = scmp.eq.s32.totalorder %s13, 0
    %p201 = por %p199, %p200
    %p202 = scmp.ne.s32.totalorder %s191, %s194
    %p203 = scmp.eq.s32.totalorder %s18, 1
    %p204 = por %p202, %p203
    %p205 = scmp.ne.s32.totalorder %s194, %s195
    %p206 = scmp.eq.s32.totalorder %s18, 0
    %p207 = por %p205, %p206
    %p208 = scmp.ne.s32.totalorder %s194, %s195
    %p209 = scmp.eq.s32.totalorder %s19, 1
    %p210 = por %p208, %p209
    %p212 = scmp.ne.s32.totalorder %s195, %s211
    %p213 = scmp.eq.s32.totalorder %s19, 0
    %p214 = por %p212, %p213
    %p215 = scmp.le.s32.totalorder 1, %s13
    %p216 = scmp.lt.s32.totalorder %s13, 3
    %p217 = pnand %p215, %p216
    %p218 = pneg %p217
    // Predicated region
    $region9: #{double_conv_pallas.1} parent=5 // pred_check
      _
    $region10: #{double_conv_pallas.1} parent=5 // pred_check_branch
      %220 = sbr.rel (%p217) target = $region12
    $region11: #{double_conv_pallas.1} parent=5 // pred_region
      %s221 = ssub.s32 %s13, 1
      // Predicated region
      $region13: #{double_conv_pallas.1} parent=11 // pred_check
        %p222 = pneg %p74
      $region14: #{double_conv_pallas.1} parent=11 // pred_check_branch
        %224 = sbr.rel (%p222) target = $region16
      $region15: #{double_conv_pallas.1} parent=11 // pred_region
        _
      $region16: #{double_conv_pallas.1} parent=11 // pred_fallthru
        _
      // Predicated region
      $region17: #{double_conv_pallas.1} parent=11 // pred_check
        %p225 = pneg %p95
      $region18: #{double_conv_pallas.1} parent=11 // pred_check_branch
        %227 = sbr.rel (%p225) target = $region20
      $region19: #{double_conv_pallas.1} parent=11 // pred_region
        _
      $region20: #{double_conv_pallas.1} parent=11 // pred_fallthru
        _
      // Predicated region
      $region21: #{double_conv_pallas.1} parent=11 // pred_check
        %p228 = pneg %p116
      $region22: #{double_conv_pallas.1} parent=11 // pred_check_branch
        %230 = sbr.rel (%p228) target = $region24
      $region23: #{double_conv_pallas.1} parent=11 // pred_region
        _
      $region24: #{double_conv_pallas.1} parent=11 // pred_fallthru
        _
      // Predicated region
      $region25: #{double_conv_pallas.1} parent=11 // pred_check
        %p231 = pneg %p137
      $region26: #{double_conv_pallas.1} parent=11 // pred_check_branch
        %233 = sbr.rel (%p231) target = $region28
      $region27: #{double_conv_pallas.1} parent=11 // pred_region
        _
      $region28: #{double_conv_pallas.1} parent=11 // pred_fallthru
        _
      // Predicated region
      $region29: #{double_conv_pallas.1} parent=11 // pred_check
        %p234 = pneg %p158
      $region30: #{double_conv_pallas.1} parent=11 // pred_check_branch
        %236 = sbr.rel (%p234) target = $region32
      $region31: #{double_conv_pallas.1} parent=11 // pred_region
        _
      $region32: #{double_conv_pallas.1} parent=11 // pred_fallthru
        _
      // Predicated region
      $region33: #{double_conv_pallas.1} parent=11 // pred_check
        %p237 = pneg %p179
      $region34: #{double_conv_pallas.1} parent=11 // pred_check_branch
        %239 = sbr.rel (%p237) target = $region36
      $region35: #{double_conv_pallas.1} parent=11 // pred_region
        _
      $region36: #{double_conv_pallas.1} parent=11 // pred_fallthru
        _
    $region12: #{double_conv_pallas.1} parent=5 // pred_fallthru
      _
    %p240 = scmp.lt.s32.totalorder %s13, 2
    // Predicated region
    $region37: #{double_conv_pallas.1} parent=5 // pred_check
      %p241 = pneg %p240
    $region38: #{double_conv_pallas.1} parent=5 // pred_check_branch
      %243 = sbr.rel (%p241) target = $region40
    $region39: #{double_conv_pallas.1} parent=5 // pred_region
      // Predicated region
      $region41: #{double_conv_pallas.1} parent=39 // pred_check
        %p244 = pneg %p47
      $region42: #{double_conv_pallas.1} parent=39 // pred_check_branch
        %246 = sbr.rel (%p244) target = $region44
      $region43: #{double_conv_pallas.1} parent=39 // pred_region
        %p247 = scmp.lt.s32.totalorder %s20, 1
        %s248 = scalar_select %p247, %s20, 1
        %p249 = scmp.lt.s32.totalorder %s21, 0
        %s250 = scalar_select %p249, %s21, 0
        %s251 = smul.addr %s250, 3
        %s252 = smul.addr %s248, 3
        %s253 = sadd.s32 %s251, %s252
        %s254 = smul.addr %s253, 4
        %s255 = scalar_lea.vmem %s0, %s254
      $region44: #{double_conv_pallas.1} parent=39 // pred_fallthru
        _
    $region40: #{double_conv_pallas.1} parent=5 // pred_fallthru
      _
    %p256 = scmp.le.s32.totalorder 1, %s13
    %p257 = scmp.lt.s32.totalorder %s13, 3
    %p258 = pnand %p256, %p257
    %p259 = pneg %p258
    // Predicated region
    $region45: #{double_conv_pallas.1} parent=5 // pred_check
      _
    $region46: #{double_conv_pallas.1} parent=5 // pred_check_branch
      %261 = sbr.rel (%p258) target = $region48
    $region47: #{double_conv_pallas.1} parent=5 // pred_region
      %s262 = ssub.s32 %s13, 1
      %p263 = scmp.lt.s32.totalorder %s22, 1
      %s264 = scalar_select %p263, %s22, 1
      %p265 = scmp.lt.s32.totalorder %s23, 0
      %s266 = scalar_select %p265, %s23, 0
      %s267 = smul.addr %s266, 3
      %s268 = smul.addr %s264, 3
      %s269 = sadd.s32 %s267, %s268
      %s270 = smul.addr %s269, 4
      %s271 = scalar_lea.vmem %s0, %s270
      %p272 = pneg %p53
      %p273 = pneg %p50
      %p274 = pneg %p74
      %p275 = pneg %p71
      %p276 = pneg %p95
      %p277 = pneg %p92
      %p278 = pneg %p116
      %p279 = pneg %p113
      %p280 = pneg %p137
      %p281 = pneg %p134
      %p282 = pneg %p158
      %p283 = pneg %p155
      %p284 = pneg %p179
      %p285 = pneg %p176
      %p286 = pneg %p207
      %p287 = pneg %p204
      %p288 = scmp.lt.s32.totalorder %s22, 1
      %s289 = scalar_select %p288, %s22, 1
      %p290 = scmp.lt.s32.totalorder %s23, 0
      %s291 = scalar_select %p290, %s23, 0
      %s292 = smul.addr %s291, 2
      %s293 = smul.addr %s289, 2
      %s294 = sadd.s32 %s292, %s293
      %s295 = smul.addr %s294, 8
      %s296 = scalar_lea.vmem %s7, %s295
      %p297 = scmp.lt.s32.totalorder %s22, 1
      %s298 = scalar_select %p297, %s22, 1
      %p299 = scmp.lt.s32.totalorder %s23, 0
      %s300 = scalar_select %p299, %s23, 0
      %s301 = smul.addr %s300, 3
      %s302 = smul.addr %s298, 3
      %s303 = sadd.s32 %s301, %s302
      %s304 = smul.addr %s303, 4
      %s305 = scalar_lea.vmem %s0, %s304
      %p306 = scmp.lt.s32.totalorder %s22, 1
      %s307 = scalar_select %p306, %s22, 1
      %p308 = scmp.lt.s32.totalorder %s23, 0
      %s309 = scalar_select %p308, %s23, 0
      %s310 = smul.addr %s309, 2
      %s311 = smul.addr %s307, 2
      %s312 = sadd.s32 %s310, %s311
      %s313 = smul.addr %s312, 8
      %s314 = scalar_lea.vmem %s7, %s313
      %316 = vst [vmem:[#allocation2] sm:$0xf] 0
      %317 = vst [vmem:[#allocation2 + $0x4] sm:$0xf] 0
      %318 = vst [vmem:[#allocation2 + $0x8] sm:$0x3] 0
      %v319 = vld [vmem:[%s305] sm:$0xf]
      %v320 = vld [vmem:[%s305 + $0x4] sm:$0xf]
      %v321 = vld [vmem:[%s305 + $0x8] sm:$0x3]
      %vm322 = vcmask 27648
      %323 = vst.msk [vmem:[#allocation2] sm:$0xf] %vm322, %v319
      %324 = vst.msk [vmem:[#allocation2 + $0x4] sm:$0xf] %vm322, %v320
      %vm325 = vcmask 25600
      %326 = vst.msk [vmem:[#allocation2 + $0x8] sm:$0x3] %vm325, %v321
      %v327 = vld [vmem:[#allocation2] sm:$0xf]
      %v328 = vld [vmem:[#allocation2 + $0x4] sm:$0xf]
      %v329 = vld [vmem:[#allocation2 + $0x8] sm:$0x1]
      %v330 = vld [vmem:[%s1] sm:$0xf]
      %v331 = vld [vmem:[%s1 + $0x4] sm:$0xf]
      %v332 = vld [vmem:[%s1 + $0x8] sm:$0xf]
      %v333 = vld [vmem:[%s1 + $0xc] sm:$0xf]
      %v334 = vld [vmem:[%s1 + $0x10] sm:$0xf]
      %v335 = vld [vmem:[%s1 + $0x14] sm:$0xf]
      %v336 = vld [vmem:[%s1 + $0x18] sm:$0xf]
      %v337 = vld [vmem:[%s1 + $0x1c] sm:$0xf]
      %v338 = vld [vmem:[%s1 + $0x20] sm:$0xf]
      %v339 = vld [vmem:[%s1 + $0x24] sm:$0xf]
      %v340 = vld [vmem:[%s1 + $0x28] sm:$0xf]
      %v341 = vld [vmem:[%s1 + $0x2c] sm:$0xf]
      %v342 = vld [vmem:[%s1 + $0x30] sm:$0xf]
      %v343 = vld [vmem:[%s1 + $0x34] sm:$0xf]
      %v344 = vld [vmem:[%s1 + $0x38] sm:$0xf]
      %v345 = vld [vmem:[%s1 + $0x3c] sm:$0xf]
      %v346 = vld [vmem:[#allocation2 + $0x8] sm:$0x3]
      %s347 = scalar_lea.vmem %s1, 64
      %v348 = vld [vmem:[%s347] sm:$0xf]
      %v349 = vld [vmem:[%s347 + $0x4] sm:$0xf]
      %v350 = vld [vmem:[%s347 + $0x8] sm:$0xf]
      %v351 = vld [vmem:[%s347 + $0xc] sm:$0xf]
      %v352 = vld [vmem:[%s347 + $0x10] sm:$0xf]
      %v353 = vld [vmem:[%s347 + $0x14] sm:$0xf]
      %v354 = vld [vmem:[%s347 + $0x18] sm:$0xf]
      %v355 = vld [vmem:[%s347 + $0x1c] sm:$0xf]
      %v356 = vld [vmem:[%s347 + $0x20] sm:$0xf]
      %v357 = vld [vmem:[%s347 + $0x24] sm:$0xf]
      %v358 = vld [vmem:[%s347 + $0x28] sm:$0xf]
      %v359 = vld [vmem:[%s347 + $0x2c] sm:$0xf]
      %v360 = vld [vmem:[%s347 + $0x30] sm:$0xf]
      %v361 = vld [vmem:[%s347 + $0x34] sm:$0xf]
      %v362 = vld [vmem:[%s347 + $0x38] sm:$0xf]
      %v363 = vld [vmem:[%s347 + $0x3c] sm:$0xf]
      %v367 = vunpack.c.l.b16 %v327
      %v368 = vunpack.c.l.b16 %v328
      %v369 = vunpack.c.l.b16 %v346
      %v370 = vpack.c.b16 %v368, %v367
      %v371 = vpack.c.b16 %v369, %v369
      %vm372 = vsmask.f32 7424
      %v374 = vshrl.u32 %v370, 16
      %v376 = vshll.u32 %v370, 16
      %v378 = vrot.slane %v376, 1
      %v379 = vor.u32 %v374, %v378
      %v381 = vshll.u32 %v371, 16
      %v383 = vrot.slane %v381, 1
      %v384 = vsel %vm372, %v379, %v383
      %v385 = vshrl.u32 %v371, 16
      %v387 = vor.u32 %v385, %v383
      %v406 = vunpack.c.l.b16 %v348
      %v407 = vunpack.c.l.b16 %v349
      %v408 = vunpack.c.l.b16 %v350
      %v409 = vunpack.c.l.b16 %v351
      %v410 = vunpack.c.l.b16 %v352
      %v411 = vunpack.c.l.b16 %v353
      %v412 = vunpack.c.l.b16 %v354
      %v413 = vunpack.c.l.b16 %v355
      %v414 = vunpack.c.l.b16 %v356
      %v415 = vunpack.c.l.b16 %v357
      %v416 = vunpack.c.l.b16 %v358
      %v417 = vunpack.c.l.b16 %v359
      %v418 = vunpack.c.l.b16 %v360
      %v419 = vunpack.c.l.b16 %v361
      %v420 = vunpack.c.l.b16 %v362
      %v421 = vunpack.c.l.b16 %v363
      %v422 = vpack.c.b16 %v407, %v406
      %v423 = vpack.c.b16 %v409, %v408
      %v424 = vpack.c.b16 %v411, %v410
      %v425 = vpack.c.b16 %v413, %v412
      %v426 = vpack.c.b16 %v415, %v414
      %v427 = vpack.c.b16 %v417, %v416
      %v428 = vpack.c.b16 %v419, %v418
      %v429 = vpack.c.b16 %v421, %v420
      %438 = vmatprep.subr.bf16.mxu0 0
      %439 = vmatpush1.bf16.msra.mxu0 %v422
      %440 = vmatprep.subr.bf16.mxu0 0
      %441 = vmatpush1.bf16.msra.mxu0 %v423
      %442 = vmatprep.subr.bf16.mxu0 0
      %443 = vmatpush1.bf16.msra.mxu0 %v424
      %444 = vmatprep.subr.bf16.mxu0 0
      %445 = vmatpush1.bf16.msra.mxu0 %v425
      %446 = vmatprep.subr.bf16.mxu0 0
      %447 = vmatpush1.bf16.msra.mxu0 %v426
      %448 = vmatprep.subr.bf16.mxu0 0
      %449 = vmatpush1.bf16.msra.mxu0 %v427
      %450 = vmatprep.subr.bf16.mxu0 0
      %451 = vmatpush1.bf16.msra.mxu0 %v428
      %452 = vmatprep.subr.bf16.mxu0 0
      %453 = vmatpush1.bf16.msra.mxu0 %v429
      %454 = vmatprep.subr.bf16.mxu0 0
      %455 = vmatpush1.bf16.msra.mxu0 0
      %456 = vmatprep.subr.bf16.mxu0 0
      %457 = vmatpush1.bf16.msra.mxu0 0
      %458 = vmatprep.subr.bf16.mxu0 0
      %459 = vmatpush1.bf16.msra.mxu0 0
      %460 = vmatprep.subr.bf16.mxu0 0
      %461 = vmatpush1.bf16.msra.mxu0 0
      %462 = vmatprep.subr.bf16.mxu0 0
      %463 = vmatpush1.bf16.msra.mxu0 0
      %464 = vmatprep.subr.bf16.mxu0 0
      %465 = vmatpush1.bf16.msra.mxu0 0
      %466 = vmatprep.subr.bf16.mxu0 0
      %467 = vmatpush1.bf16.msra.mxu0 0
      %468 = vmatprep.subr.bf16.mxu0 0
      %469 = vmatpush1.bf16.msra.mxu0 0
      %470 = vmatprep.mubr.bf16.mxu0 0
      %471 = vmatmul.mubr.bf16.gmra.mrb[0].mxu0 %v384
      %v472 = vpop.f32.mrb[0].mxu0
      %v473 = vadd.f32 0.0, %v472
      %v474 = vpop.f32.mrb[0].mxu0
      %v475 = vpop.f32.mrb[0].mxu0
      %v476 = vadd.f32 0.0, %v475
      %v477 = vpop.f32.mrb[0].mxu0
      %478 = vmatprep.mubr.bf16.mxu0 0
      %479 = vmatmul.mubr.bf16.gmra.mrb[0].mxu0 %v387
      %v480 = vpop.f32.mrb[0].mxu0
      %v481 = vadd.f32 0.0, %v480
      %v482 = vpop.f32.mrb[0].mxu0
      %v483 = vpop.f32.mrb[0].mxu0
      %v484 = vpop.f32.mrb[0].mxu0
      %485 = vdwg.mxu0
      %v487 = vunpack.c.l.b16 %v329
      %v488 = vpack.c.b16 %v487, %v487
      %v507 = vunpack.c.l.b16 %v330
      %v508 = vunpack.c.l.b16 %v331
      %v509 = vunpack.c.l.b16 %v332
      %v510 = vunpack.c.l.b16 %v333
      %v511 = vunpack.c.l.b16 %v334
      %v512 = vunpack.c.l.b16 %v335
      %v513 = vunpack.c.l.b16 %v336
      %v514 = vunpack.c.l.b16 %v337
      %v515 = vunpack.c.l.b16 %v338
      %v516 = vunpack.c.l.b16 %v339
      %v517 = vunpack.c.l.b16 %v340
      %v518 = vunpack.c.l.b16 %v341
      %v519 = vunpack.c.l.b16 %v342
      %v520 = vunpack.c.l.b16 %v343
      %v521 = vunpack.c.l.b16 %v344
      %v522 = vunpack.c.l.b16 %v345
      %v523 = vpack.c.b16 %v508, %v507
      %v524 = vpack.c.b16 %v510, %v509
      %v525 = vpack.c.b16 %v512, %v511
      %v526 = vpack.c.b16 %v514, %v513
      %v527 = vpack.c.b16 %v516, %v515
      %v528 = vpack.c.b16 %v518, %v517
      %v529 = vpack.c.b16 %v520, %v519
      %v530 = vpack.c.b16 %v522, %v521
      %539 = vmatprep.subr.bf16.mxu0 0
      %540 = vmatpush1.bf16.msra.mxu0 %v523
      %541 = vmatprep.subr.bf16.mxu0 0
      %542 = vmatpush1.bf16.msra.mxu0 %v524
      %543 = vmatprep.subr.bf16.mxu0 0
      %544 = vmatpush1.bf16.msra.mxu0 %v525
      %545 = vmatprep.subr.bf16.mxu0 0
      %546 = vmatpush1.bf16.msra.mxu0 %v526
      %547 = vmatprep.subr.bf16.mxu0 0
      %548 = vmatpush1.bf16.msra.mxu0 %v527
      %549 = vmatprep.subr.bf16.mxu0 0
      %550 = vmatpush1.bf16.msra.mxu0 %v528
      %551 = vmatprep.subr.bf16.mxu0 0
      %552 = vmatpush1.bf16.msra.mxu0 %v529
      %553 = vmatprep.subr.bf16.mxu0 0
      %554 = vmatpush1.bf16.msra.mxu0 %v530
      %555 = vmatprep.subr.bf16.mxu0 0
      %556 = vmatpush1.bf16.msra.mxu0 0
      %557 = vmatprep.subr.bf16.mxu0 0
      %558 = vmatpush1.bf16.msra.mxu0 0
      %559 = vmatprep.subr.bf16.mxu0 0
      %560 = vmatpush1.bf16.msra.mxu0 0
      %561 = vmatprep.subr.bf16.mxu0 0
      %562 = vmatpush1.bf16.msra.mxu0 0
      %563 = vmatprep.subr.bf16.mxu0 0
      %564 = vmatpush1.bf16.msra.mxu0 0
      %565 = vmatprep.subr.bf16.mxu0 0
      %566 = vmatpush1.bf16.msra.mxu0 0
      %567 = vmatprep.subr.bf16.mxu0 0
      %568 = vmatpush1.bf16.msra.mxu0 0
      %569 = vmatprep.subr.bf16.mxu0 0
      %570 = vmatpush1.bf16.msra.mxu0 0
      %571 = vmatprep.mubr.bf16.mxu0 0
      %572 = vmatmul.mubr.bf16.gmra.mrb[0].mxu0 %v370
      %v573 = vpop.f32.mrb[0].mxu0
      %v574 = vadd.f32 %v473, %v573
      %v575 = vpop.f32.mrb[0].mxu0
      %v576 = vpop.f32.mrb[0].mxu0
      %v577 = vadd.f32 %v476, %v576
      %v578 = vpop.f32.mrb[0].mxu0
      %579 = vmatprep.mubr.bf16.mxu0 0
      %580 = vmatmul.mubr.bf16.gmra.mrb[0].mxu0 %v488
      %v581 = vpop.f32.mrb[0].mxu0
      %v582 = vadd.f32 %v481, %v581
      %v583 = vpop.f32.mrb[0].mxu0
      %v584 = vpop.f32.mrb[0].mxu0
      %v585 = vpop.f32.mrb[0].mxu0
      %586 = vdwg.mxu0
      %v587 = vld [vmem:[#allocation2] sm:$0xe]
      %s588 = scalar_lea.vmem %s1, 128
      %v589 = vld [vmem:[%s588] sm:$0xf]
      %v590 = vld [vmem:[%s588 + $0x4] sm:$0xf]
      %v591 = vld [vmem:[%s588 + $0x8] sm:$0xf]
      %v592 = vld [vmem:[%s588 + $0xc] sm:$0xf]
      %v593 = vld [vmem:[%s588 + $0x10] sm:$0xf]
      %v594 = vld [vmem:[%s588 + $0x14] sm:$0xf]
      %v595 = vld [vmem:[%s588 + $0x18] sm:$0xf]
      %v596 = vld [vmem:[%s588 + $0x1c] sm:$0xf]
      %v597 = vld [vmem:[%s588 + $0x20] sm:$0xf]
      %v598 = vld [vmem:[%s588 + $0x24] sm:$0xf]
      %v599 = vld [vmem:[%s588 + $0x28] sm:$0xf]
      %v600 = vld [vmem:[%s588 + $0x2c] sm:$0xf]
      %v601 = vld [vmem:[%s588 + $0x30] sm:$0xf]
      %v602 = vld [vmem:[%s588 + $0x34] sm:$0xf]
      %v603 = vld [vmem:[%s588 + $0x38] sm:$0xf]
      %v604 = vld [vmem:[%s588 + $0x3c] sm:$0xf]
      %v606 = vunpack.c.l.b16 %v587
      %v607 = vpack.c.b16 %v368, %v606
      %vm608 = vcmask 1046528
      %v609 = vrot.slane %v607, 1
      %v610 = vrot.slane %v371, 1
      %v611 = vsel %vm608, %v609, %v610
      %v630 = vunpack.c.l.b16 %v589
      %v631 = vunpack.c.l.b16 %v590
      %v632 = vunpack.c.l.b16 %v591
      %v633 = vunpack.c.l.b16 %v592
      %v634 = vunpack.c.l.b16 %v593
      %v635 = vunpack.c.l.b16 %v594
      %v636 = vunpack.c.l.b16 %v595
      %v637 = vunpack.c.l.b16 %v596
      %v638 = vunpack.c.l.b16 %v597
      %v639 = vunpack.c.l.b16 %v598
      %v640 = vunpack.c.l.b16 %v599
      %v641 = vunpack.c.l.b16 %v600
      %v642 = vunpack.c.l.b16 %v601
      %v643 = vunpack.c.l.b16 %v602
      %v644 = vunpack.c.l.b16 %v603
      %v645 = vunpack.c.l.b16 %v604
      %v646 = vpack.c.b16 %v631, %v630
      %v647 = vpack.c.b16 %v633, %v632
      %v648 = vpack.c.b16 %v635, %v634
      %v649 = vpack.c.b16 %v637, %v636
      %v650 = vpack.c.b16 %v639, %v638
      %v651 = vpack.c.b16 %v641, %v640
      %v652 = vpack.c.b16 %v643, %v642
      %v653 = vpack.c.b16 %v645, %v644
      %662 = vmatprep.subr.bf16.mxu0 0
      %663 = vmatpush1.bf16.msra.mxu0 %v646
      %664 = vmatprep.subr.bf16.mxu0 0
      %665 = vmatpush1.bf16.msra.mxu0 %v647
      %666 = vmatprep.subr.bf16.mxu0 0
      %667 = vmatpush1.bf16.msra.mxu0 %v648
      %668 = vmatprep.subr.bf16.mxu0 0
      %669 = vmatpush1.bf16.msra.mxu0 %v649
      %670 = vmatprep.subr.bf16.mxu0 0
      %671 = vmatpush1.bf16.msra.mxu0 %v650
      %672 = vmatprep.subr.bf16.mxu0 0
      %673 = vmatpush1.bf16.msra.mxu0 %v651
      %674 = vmatprep.subr.bf16.mxu0 0
      %675 = vmatpush1.bf16.msra.mxu0 %v652
      %676 = vmatprep.subr.bf16.mxu0 0
      %677 = vmatpush1.bf16.msra.mxu0 %v653
      %678 = vmatprep.subr.bf16.mxu0 0
      %679 = vmatpush1.bf16.msra.mxu0 0
      %680 = vmatprep.subr.bf16.mxu0 0
      %681 = vmatpush1.bf16.msra.mxu0 0
      %682 = vmatprep.subr.bf16.mxu0 0
      %683 = vmatpush1.bf16.msra.mxu0 0
      %684 = vmatprep.subr.bf16.mxu0 0
      %685 = vmatpush1.bf16.msra.mxu0 0
      %686 = vmatprep.subr.bf16.mxu0 0
      %687 = vmatpush1.bf16.msra.mxu0 0
      %688 = vmatprep.subr.bf16.mxu0 0
      %689 = vmatpush1.bf16.msra.mxu0 0
      %690 = vmatprep.subr.bf16.mxu0 0
      %691 = vmatpush1.bf16.msra.mxu0 0
      %692 = vmatprep.subr.bf16.mxu0 0
      %693 = vmatpush1.bf16.msra.mxu0 0
      %694 = vmatprep.mubr.bf16.mxu0 0
      %695 = vmatmul.mubr.bf16.gmra.mrb[0].mxu0 %v611
      %v696 = vpop.f32.mrb[0].mxu0
      %v697 = vadd.f32 0.0, %v696
      %v698 = vpop.f32.mrb[0].mxu0
      %v699 = vpop.f32.mrb[0].mxu0
      %v700 = vadd.f32 0.0, %v699
      %v701 = vpop.f32.mrb[0].mxu0
      %702 = vmatprep.mubr.bf16.mxu0 0
      %703 = vmatmul.mubr.bf16.gmra.mrb[0].mxu0 %v610
      %v704 = vpop.f32.mrb[0].mxu0
      %v705 = vadd.f32 0.0, %v704
      %v706 = vpop.f32.mrb[0].mxu0
      %v707 = vpop.f32.mrb[0].mxu0
      %v708 = vpop.f32.mrb[0].mxu0
      %709 = vdwg.mxu0
      %v710 = vadd.f32 %v574, %v697
      %v711 = vadd.f32 %v577, %v700
      %v712 = vadd.f32 %v582, %v705
      %v713 = vld [vmem:[%s2] sm:$0x1]
      %v715 = vlaneseq
      %v716 = vshrl.u32 %v715, 7
      %v717 = vsub.s32 0, %v716
      %v718 = vrot.slane %v713, %v717
      %v720 = vadd.f32 %v710, %v718
      %v721 = vadd.f32 %v711, %v718
      %v722 = vadd.f32 %v712, %v718
      %v723 = vmax.f32 %v720, 0.0
      %v724 = vmax.f32 %v721, 0.0
      %v725 = vmax.f32 %v722, 0.0
      %v726 = vpack.c.bf16 %v724, %v723
      %v727 = vpack.c.bf16 %v725, %v725
      %v728 = vld [vmem:[%s3] sm:$0xf]
      %v729 = vld [vmem:[%s3 + $0x4] sm:$0xf]
      %v730 = vld [vmem:[%s3 + $0x8] sm:$0xf]
      %v731 = vld [vmem:[%s3 + $0xc] sm:$0xf]
      %v732 = vld [vmem:[%s3 + $0x10] sm:$0xf]
      %v733 = vld [vmem:[%s3 + $0x14] sm:$0xf]
      %v734 = vld [vmem:[%s3 + $0x18] sm:$0xf]
      %v735 = vld [vmem:[%s3 + $0x1c] sm:$0xf]
      %v736 = vld [vmem:[%s3 + $0x20] sm:$0xf]
      %v737 = vld [vmem:[%s3 + $0x24] sm:$0xf]
      %v738 = vld [vmem:[%s3 + $0x28] sm:$0xf]
      %v739 = vld [vmem:[%s3 + $0x2c] sm:$0xf]
      %v740 = vld [vmem:[%s3 + $0x30] sm:$0xf]
      %v741 = vld [vmem:[%s3 + $0x34] sm:$0xf]
      %v742 = vld [vmem:[%s3 + $0x38] sm:$0xf]
      %v743 = vld [vmem:[%s3 + $0x3c] sm:$0xf]
      %v744 = vld [vmem:[%s4] sm:$0x1]
      %v746 = vlaneseq
      %v747 = vshrl.u32 %v746, 7
      %v748 = vsub.s32 0, %v747
      %v749 = vrot.slane %v744, %v748
      %v767 = vunpack.c.l.b16 %v728
      %v768 = vunpack.c.l.b16 %v729
      %v769 = vunpack.c.l.b16 %v730
      %v770 = vunpack.c.l.b16 %v731
      %v771 = vunpack.c.l.b16 %v732
      %v772 = vunpack.c.l.b16 %v733
      %v773 = vunpack.c.l.b16 %v734
      %v774 = vunpack.c.l.b16 %v735
      %v775 = vunpack.c.l.b16 %v736
      %v776 = vunpack.c.l.b16 %v737
      %v777 = vunpack.c.l.b16 %v738
      %v778 = vunpack.c.l.b16 %v739
      %v779 = vunpack.c.l.b16 %v740
      %v780 = vunpack.c.l.b16 %v741
      %v781 = vunpack.c.l.b16 %v742
      %v782 = vunpack.c.l.b16 %v743
      %v783 = vpack.c.b16 %v768, %v767
      %v784 = vpack.c.b16 %v770, %v769
      %v785 = vpack.c.b16 %v772, %v771
      %v786 = vpack.c.b16 %v774, %v773
      %v787 = vpack.c.b16 %v776, %v775
      %v788 = vpack.c.b16 %v778, %v777
      %v789 = vpack.c.b16 %v780, %v779
      %v790 = vpack.c.b16 %v782, %v781
      %799 = vmatprep.subr.bf16.mxu0 0
      %800 = vmatpush1.bf16.msra.mxu0 %v783
      %801 = vmatprep.subr.bf16.mxu0 0
      %802 = vmatpush1.bf16.msra.mxu0 %v784
      %803 = vmatprep.subr.bf16.mxu0 0
      %804 = vmatpush1.bf16.msra.mxu0 %v785
      %805 = vmatprep.subr.bf16.mxu0 0
      %806 = vmatpush1.bf16.msra.mxu0 %v786
      %807 = vmatprep.subr.bf16.mxu0 0
      %808 = vmatpush1.bf16.msra.mxu0 %v787
      %809 = vmatprep.subr.bf16.mxu0 0
      %810 = vmatpush1.bf16.msra.mxu0 %v788
      %811 = vmatprep.subr.bf16.mxu0 0
      %812 = vmatpush1.bf16.msra.mxu0 %v789
      %813 = vmatprep.subr.bf16.mxu0 0
      %814 = vmatpush1.bf16.msra.mxu0 %v790
      %815 = vmatprep.subr.bf16.mxu0 0
      %816 = vmatpush1.bf16.msra.mxu0 0
      %817 = vmatprep.subr.bf16.mxu0 0
      %818 = vmatpush1.bf16.msra.mxu0 0
      %819 = vmatprep.subr.bf16.mxu0 0
      %820 = vmatpush1.bf16.msra.mxu0 0
      %821 = vmatprep.subr.bf16.mxu0 0
      %822 = vmatpush1.bf16.msra.mxu0 0
      %823 = vmatprep.subr.bf16.mxu0 0
      %824 = vmatpush1.bf16.msra.mxu0 0
      %825 = vmatprep.subr.bf16.mxu0 0
      %826 = vmatpush1.bf16.msra.mxu0 0
      %827 = vmatprep.subr.bf16.mxu0 0
      %828 = vmatpush1.bf16.msra.mxu0 0
      %829 = vmatprep.subr.bf16.mxu0 0
      %830 = vmatpush1.bf16.msra.mxu0 0
      %831 = vmatprep.mubr.bf16.mxu0 0
      %832 = vmatmul.mubr.bf16.gmra.mrb[0].mxu0 %v726
      %v833 = vpop.f32.mrb[0].mxu0
      %v834 = vadd.f32 %v749, %v833
      %v835 = vpop.f32.mrb[0].mxu0
      %v836 = vpop.f32.mrb[0].mxu0
      %v837 = vadd.f32 %v749, %v836
      %v838 = vpop.f32.mrb[0].mxu0
      %839 = vmatprep.mubr.bf16.mxu0 0
      %840 = vmatmul.mubr.bf16.gmra.mrb[0].mxu0 %v727
      %v841 = vpop.f32.mrb[0].mxu0
      %v842 = vadd.f32 %v749, %v841
      %v843 = vpop.f32.mrb[0].mxu0
      %v844 = vpop.f32.mrb[0].mxu0
      %v845 = vpop.f32.mrb[0].mxu0
      %846 = vdwg.mxu0
      %v847 = vmax.f32 %v834, 0.0
      %v848 = vmax.f32 %v837, 0.0
      %v849 = vmax.f32 %v842, 0.0
      %v850 = vlaneseq
      %v851 = vshrl.u32 %v850, 7
      %v852 = vadd.s32 %v851, 8
      %v853 = vadd.s32 %v851, 16
      %s854 = smul.u32 %s23, 16
      %v855 = vstv %s854
      %v856 = vadd.s32 %v855, %v851
      %v857 = vadd.s32 %v855, %v852
      %v858 = vadd.s32 %v855, %v853
      %v859 = vsub.s32 %v856, 1
      %v860 = vsub.s32 %v857, 1
      %v861 = vsub.s32 %v858, 1
      %vm862 = vcmp.ge.s32.totalorder %v859, 0
      %vm863 = vcmp.ge.s32.totalorder %v860, 0
      %vm864 = vcmp.ge.s32.totalorder %v861, 0
      %vm865 = vcmp.lt.s32.totalorder %v859, 16
      %vm866 = vcmp.lt.s32.totalorder %v860, 16
      %vm867 = vcmp.lt.s32.totalorder %v861, 16
      %vm868 = vmand %vm862, %vm865
      %vm869 = vmand %vm863, %vm866
      %vm870 = vmand %vm864, %vm867
      %v871 = vsel %vm868, 1, 0
      %v872 = vsel %vm869, 1, 0
      %v873 = vsel %vm870, 1, 0
      %vm874 = vcmp.eq.s32.totalorder %v871, 1
      %vm875 = vcmp.eq.s32.totalorder %v872, 1
      %vm876 = vcmp.eq.s32.totalorder %v873, 1
      %v877 = vsel %vm874, %v847, 0.0
      %v878 = vsel %vm875, %v848, 0.0
      %v879 = vsel %vm876, %v849, 0.0
      %v880 = vpack.c.bf16 %v878, %v877
      %v881 = vpack.c.bf16 %v879, %v879
      %v882 = vld [vmem:[%s5] sm:$0xf]
      %v883 = vld [vmem:[%s5 + $0x4] sm:$0xf]
      %v884 = vld [vmem:[%s5 + $0x8] sm:$0xf]
      %v885 = vld [vmem:[%s5 + $0xc] sm:$0xf]
      %v886 = vld [vmem:[%s5 + $0x10] sm:$0xf]
      %v887 = vld [vmem:[%s5 + $0x14] sm:$0xf]
      %v888 = vld [vmem:[%s5 + $0x18] sm:$0xf]
      %v889 = vld [vmem:[%s5 + $0x1c] sm:$0xf]
      %v890 = vld [vmem:[%s5 + $0x20] sm:$0xf]
      %v891 = vld [vmem:[%s5 + $0x24] sm:$0xf]
      %v892 = vld [vmem:[%s5 + $0x28] sm:$0xf]
      %v893 = vld [vmem:[%s5 + $0x2c] sm:$0xf]
      %v894 = vld [vmem:[%s5 + $0x30] sm:$0xf]
      %v895 = vld [vmem:[%s5 + $0x34] sm:$0xf]
      %v896 = vld [vmem:[%s5 + $0x38] sm:$0xf]
      %v897 = vld [vmem:[%s5 + $0x3c] sm:$0xf]
      %s898 = scalar_lea.vmem %s5, 64
      %v899 = vld [vmem:[%s898] sm:$0xf]
      %v900 = vld [vmem:[%s898 + $0x4] sm:$0xf]
      %v901 = vld [vmem:[%s898 + $0x8] sm:$0xf]
      %v902 = vld [vmem:[%s898 + $0xc] sm:$0xf]
      %v903 = vld [vmem:[%s898 + $0x10] sm:$0xf]
      %v904 = vld [vmem:[%s898 + $0x14] sm:$0xf]
      %v905 = vld [vmem:[%s898 + $0x18] sm:$0xf]
      %v906 = vld [vmem:[%s898 + $0x1c] sm:$0xf]
      %v907 = vld [vmem:[%s898 + $0x20] sm:$0xf]
      %v908 = vld [vmem:[%s898 + $0x24] sm:$0xf]
      %v909 = vld [vmem:[%s898 + $0x28] sm:$0xf]
      %v910 = vld [vmem:[%s898 + $0x2c] sm:$0xf]
      %v911 = vld [vmem:[%s898 + $0x30] sm:$0xf]
      %v912 = vld [vmem:[%s898 + $0x34] sm:$0xf]
      %v913 = vld [vmem:[%s898 + $0x38] sm:$0xf]
      %v914 = vld [vmem:[%s898 + $0x3c] sm:$0xf]
      %v916 = vshrl.u32 %v880, 16
      %v918 = vshll.u32 %v880, 16
      %v920 = vrot.slane %v918, 1
      %v921 = vor.u32 %v916, %v920
      %v923 = vshll.u32 %v881, 16
      %v925 = vrot.slane %v923, 1
      %v926 = vsel %vm372, %v921, %v925
      %v944 = vunpack.c.l.b16 %v899
      %v945 = vunpack.c.l.b16 %v900
      %v946 = vunpack.c.l.b16 %v901
      %v947 = vunpack.c.l.b16 %v902
      %v948 = vunpack.c.l.b16 %v903
      %v949 = vunpack.c.l.b16 %v904
      %v950 = vunpack.c.l.b16 %v905
      %v951 = vunpack.c.l.b16 %v906
      %v952 = vunpack.c.l.b16 %v907
      %v953 = vunpack.c.l.b16 %v908
      %v954 = vunpack.c.l.b16 %v909
      %v955 = vunpack.c.l.b16 %v910
      %v956 = vunpack.c.l.b16 %v911
      %v957 = vunpack.c.l.b16 %v912
      %v958 = vunpack.c.l.b16 %v913
      %v959 = vunpack.c.l.b16 %v914
      %v960 = vpack.c.b16 %v945, %v944
      %v961 = vpack.c.b16 %v947, %v946
      %v962 = vpack.c.b16 %v949, %v948
      %v963 = vpack.c.b16 %v951, %v950
      %v964 = vpack.c.b16 %v953, %v952
      %v965 = vpack.c.b16 %v955, %v954
      %v966 = vpack.c.b16 %v957, %v956
      %v967 = vpack.c.b16 %v959, %v958
      %976 = vmatprep.subr.bf16.mxu0 0
      %977 = vmatpush1.bf16.msra.mxu0 %v960
      %978 = vmatprep.subr.bf16.mxu0 0
      %979 = vmatpush1.bf16.msra.mxu0 %v961
      %980 = vmatprep.subr.bf16.mxu0 0
      %981 = vmatpush1.bf16.msra.mxu0 %v962
      %982 = vmatprep.subr.bf16.mxu0 0
      %983 = vmatpush1.bf16.msra.mxu0 %v963
      %984 = vmatprep.subr.bf16.mxu0 0
      %985 = vmatpush1.bf16.msra.mxu0 %v964
      %986 = vmatprep.subr.bf16.mxu0 0
      %987 = vmatpush1.bf16.msra.mxu0 %v965
      %988 = vmatprep.subr.bf16.mxu0 0
      %989 = vmatpush1.bf16.msra.mxu0 %v966
      %990 = vmatprep.subr.bf16.mxu0 0
      %991 = vmatpush1.bf16.msra.mxu0 %v967
      %992 = vmatprep.subr.bf16.mxu0 0
      %993 = vmatpush1.bf16.msra.mxu0 0
      %994 = vmatprep.subr.bf16.mxu0 0
      %995 = vmatpush1.bf16.msra.mxu0 0
      %996 = vmatprep.subr.bf16.mxu0 0
      %997 = vmatpush1.bf16.msra.mxu0 0
      %998 = vmatprep.subr.bf16.mxu0 0
      %999 = vmatpush1.bf16.msra.mxu0 0
      %1000 = vmatprep.subr.bf16.mxu0 0
      %1001 = vmatpush1.bf16.msra.mxu0 0
      %1002 = vmatprep.subr.bf16.mxu0 0
      %1003 = vmatpush1.bf16.msra.mxu0 0
      %1004 = vmatprep.subr.bf16.mxu0 0
      %1005 = vmatpush1.bf16.msra.mxu0 0
      %1006 = vmatprep.subr.bf16.mxu0 0
      %1007 = vmatpush1.bf16.msra.mxu0 0
      %1008 = vmatprep.mubr.bf16.mxu0 0
      %1009 = vmatmul.mubr.bf16.gmra.mrb[0].mxu0 %v926
      %v1010 = vpop.f32.mrb[0].mxu0
      %v1011 = vadd.f32 0.0, %v1010
      %v1012 = vpop.f32.mrb[0].mxu0
      %v1013 = vpop.f32.mrb[0].mxu0
      %v1014 = vadd.f32 0.0, %v1013
      %v1015 = vpop.f32.mrb[0].mxu0
      %1016 = vdwg.mxu0
      %v1033 = vunpack.c.l.b16 %v882
      %v1034 = vunpack.c.l.b16 %v883
      %v1035 = vunpack.c.l.b16 %v884
      %v1036 = vunpack.c.l.b16 %v885
      %v1037 = vunpack.c.l.b16 %v886
      %v1038 = vunpack.c.l.b16 %v887
      %v1039 = vunpack.c.l.b16 %v888
      %v1040 = vunpack.c.l.b16 %v889
      %v1041 = vunpack.c.l.b16 %v890
      %v1042 = vunpack.c.l.b16 %v891
      %v1043 = vunpack.c.l.b16 %v892
      %v1044 = vunpack.c.l.b16 %v893
      %v1045 = vunpack.c.l.b16 %v894
      %v1046 = vunpack.c.l.b16 %v895
      %v1047 = vunpack.c.l.b16 %v896
      %v1048 = vunpack.c.l.b16 %v897
      %v1049 = vpack.c.b16 %v1034, %v1033
      %v1050 = vpack.c.b16 %v1036, %v1035
      %v1051 = vpack.c.b16 %v1038, %v1037
      %v1052 = vpack.c.b16 %v1040, %v1039
      %v1053 = vpack.c.b16 %v1042, %v1041
      %v1054 = vpack.c.b16 %v1044, %v1043
      %v1055 = vpack.c.b16 %v1046, %v1045
      %v1056 = vpack.c.b16 %v1048, %v1047
      %1065 = vmatprep.subr.bf16.mxu0 0
      %1066 = vmatpush1.bf16.msra.mxu0 %v1049
      %1067 = vmatprep.subr.bf16.mxu0 0
      %1068 = vmatpush1.bf16.msra.mxu0 %v1050
      %1069 = vmatprep.subr.bf16.mxu0 0
      %1070 = vmatpush1.bf16.msra.mxu0 %v1051
      %1071 = vmatprep.subr.bf16.mxu0 0
      %1072 = vmatpush1.bf16.msra.mxu0 %v1052
      %1073 = vmatprep.subr.bf16.mxu0 0
      %1074 = vmatpush1.bf16.msra.mxu0 %v1053
      %1075 = vmatprep.subr.bf16.mxu0 0
      %1076 = vmatpush1.bf16.msra.mxu0 %v1054
      %1077 = vmatprep.subr.bf16.mxu0 0
      %1078 = vmatpush1.bf16.msra.mxu0 %v1055
      %1079 = vmatprep.subr.bf16.mxu0 0
      %1080 = vmatpush1.bf16.msra.mxu0 %v1056
      %1081 = vmatprep.subr.bf16.mxu0 0
      %1082 = vmatpush1.bf16.msra.mxu0 0
      %1083 = vmatprep.subr.bf16.mxu0 0
      %1084 = vmatpush1.bf16.msra.mxu0 0
      %1085 = vmatprep.subr.bf16.mxu0 0
      %1086 = vmatpush1.bf16.msra.mxu0 0
      %1087 = vmatprep.subr.bf16.mxu0 0
      %1088 = vmatpush1.bf16.msra.mxu0 0
      %1089 = vmatprep.subr.bf16.mxu0 0
      %1090 = vmatpush1.bf16.msra.mxu0 0
      %1091 = vmatprep.subr.bf16.mxu0 0
      %1092 = vmatpush1.bf16.msra.mxu0 0
      %1093 = vmatprep.subr.bf16.mxu0 0
      %1094 = vmatpush1.bf16.msra.mxu0 0
      %1095 = vmatprep.subr.bf16.mxu0 0
      %1096 = vmatpush1.bf16.msra.mxu0 0
      %1097 = vmatprep.mubr.bf16.mxu0 0
      %1098 = vmatmul.mubr.bf16.gmra.mrb[0].mxu0 %v880
      %v1099 = vpop.f32.mrb[0].mxu0
      %v1100 = vadd.f32 %v1011, %v1099
      %v1101 = vpop.f32.mrb[0].mxu0
      %v1102 = vpop.f32.mrb[0].mxu0
      %v1103 = vadd.f32 %v1014, %v1102
      %v1104 = vpop.f32.mrb[0].mxu0
      %1105 = vdwg.mxu0
      %s1106 = scalar_lea.vmem %s5, 128
      %v1107 = vld [vmem:[%s1106] sm:$0xf]
      %v1108 = vld [vmem:[%s1106 + $0x4] sm:$0xf]
      %v1109 = vld [vmem:[%s1106 + $0x8] sm:$0xf]
      %v1110 = vld [vmem:[%s1106 + $0xc] sm:$0xf]
      %v1111 = vld [vmem:[%s1106 + $0x10] sm:$0xf]
      %v1112 = vld [vmem:[%s1106 + $0x14] sm:$0xf]
      %v1113 = vld [vmem:[%s1106 + $0x18] sm:$0xf]
      %v1114 = vld [vmem:[%s1106 + $0x1c] sm:$0xf]
      %v1115 = vld [vmem:[%s1106 + $0x20] sm:$0xf]
      %v1116 = vld [vmem:[%s1106 + $0x24] sm:$0xf]
      %v1117 = vld [vmem:[%s1106 + $0x28] sm:$0xf]
      %v1118 = vld [vmem:[%s1106 + $0x2c] sm:$0xf]
      %v1119 = vld [vmem:[%s1106 + $0x30] sm:$0xf]
      %v1120 = vld [vmem:[%s1106 + $0x34] sm:$0xf]
      %v1121 = vld [vmem:[%s1106 + $0x38] sm:$0xf]
      %v1122 = vld [vmem:[%s1106 + $0x3c] sm:$0xf]
      %v1125 = vrot.slane %v880, 1
      %v1126 = vrot.slane %v881, 1
      %v1127 = vsel %vm608, %v1125, %v1126
      %v1145 = vunpack.c.l.b16 %v1107
      %v1146 = vunpack.c.l.b16 %v1108
      %v1147 = vunpack.c.l.b16 %v1109
      %v1148 = vunpack.c.l.b16 %v1110
      %v1149 = vunpack.c.l.b16 %v1111
      %v1150 = vunpack.c.l.b16 %v1112
      %v1151 = vunpack.c.l.b16 %v1113
      %v1152 = vunpack.c.l.b16 %v1114
      %v1153 = vunpack.c.l.b16 %v1115
      %v1154 = vunpack.c.l.b16 %v1116
      %v1155 = vunpack.c.l.b16 %v1117
      %v1156 = vunpack.c.l.b16 %v1118
      %v1157 = vunpack.c.l.b16 %v1119
      %v1158 = vunpack.c.l.b16 %v1120
      %v1159 = vunpack.c.l.b16 %v1121
      %v1160 = vunpack.c.l.b16 %v1122
      %v1161 = vpack.c.b16 %v1146, %v1145
      %v1162 = vpack.c.b16 %v1148, %v1147
      %v1163 = vpack.c.b16 %v1150, %v1149
      %v1164 = vpack.c.b16 %v1152, %v1151
      %v1165 = vpack.c.b16 %v1154, %v1153
      %v1166 = vpack.c.b16 %v1156, %v1155
      %v1167 = vpack.c.b16 %v1158, %v1157
      %v1168 = vpack.c.b16 %v1160, %v1159
      %1177 = vmatprep.subr.bf16.mxu0 0
      %1178 = vmatpush1.bf16.msra.mxu0 %v1161
      %1179 = vmatprep.subr.bf16.mxu0 0
      %1180 = vmatpush1.bf16.msra.mxu0 %v1162
      %1181 = vmatprep.subr.bf16.mxu0 0
      %1182 = vmatpush1.bf16.msra.mxu0 %v1163
      %1183 = vmatprep.subr.bf16.mxu0 0
      %1184 = vmatpush1.bf16.msra.mxu0 %v1164
      %1185 = vmatprep.subr.bf16.mxu0 0
      %1186 = vmatpush1.bf16.msra.mxu0 %v1165
      %1187 = vmatprep.subr.bf16.mxu0 0
      %1188 = vmatpush1.bf16.msra.mxu0 %v1166
      %1189 = vmatprep.subr.bf16.mxu0 0
      %1190 = vmatpush1.bf16.msra.mxu0 %v1167
      %1191 = vmatprep.subr.bf16.mxu0 0
      %1192 = vmatpush1.bf16.msra.mxu0 %v1168
      %1193 = vmatprep.subr.bf16.mxu0 0
      %1194 = vmatpush1.bf16.msra.mxu0 0
      %1195 = vmatprep.subr.bf16.mxu0 0
      %1196 = vmatpush1.bf16.msra.mxu0 0
      %1197 = vmatprep.subr.bf16.mxu0 0
      %1198 = vmatpush1.bf16.msra.mxu0 0
      %1199 = vmatprep.subr.bf16.mxu0 0
      %1200 = vmatpush1.bf16.msra.mxu0 0
      %1201 = vmatprep.subr.bf16.mxu0 0
      %1202 = vmatpush1.bf16.msra.mxu0 0
      %1203 = vmatprep.subr.bf16.mxu0 0
      %1204 = vmatpush1.bf16.msra.mxu0 0
      %1205 = vmatprep.subr.bf16.mxu0 0
      %1206 = vmatpush1.bf16.msra.mxu0 0
      %1207 = vmatprep.subr.bf16.mxu0 0
      %1208 = vmatpush1.bf16.msra.mxu0 0
      %1209 = vmatprep.mubr.bf16.mxu0 0
      %1210 = vmatmul.mubr.bf16.gmra.mrb[0].mxu0 %v1127
      %v1211 = vpop.f32.mrb[0].mxu0
      %v1212 = vadd.f32 0.0, %v1211
      %v1213 = vpop.f32.mrb[0].mxu0
      %v1214 = vpop.f32.mrb[0].mxu0
      %v1215 = vadd.f32 0.0, %v1214
      %v1216 = vpop.f32.mrb[0].mxu0
      %1217 = vdwg.mxu0
      %v1218 = vadd.f32 %v1100, %v1212
      %v1219 = vadd.f32 %v1103, %v1215
      %v1220 = vld [vmem:[%s6] sm:$0x1]
      %v1222 = vlaneseq
      %v1223 = vshrl.u32 %v1222, 7
      %v1224 = vsub.s32 0, %v1223
      %v1225 = vrot.slane %v1220, %v1224
      %v1227 = vadd.f32 %v1218, %v1225
      %v1228 = vadd.f32 %v1219, %v1225
      %v1229 = vmax.f32 %v1227, 0.0
      %v1230 = vmax.f32 %v1228, 0.0
      %vm1231 = vcmask 64512
      %1232 = vst.msk [vmem:[%s314] sm:$0xff] %vm1231, %v1229
      %1233 = vst.msk [vmem:[%s314 + $0x8] sm:$0xff] %vm1231, %v1230
      %p1234 = scmp.lt.s32.totalorder %s22, 1
      %s1235 = scalar_select %p1234, %s22, 1
      %p1236 = scmp.lt.s32.totalorder %s23, 0
      %s1237 = scalar_select %p1236, %s23, 0
      %s1238 = smul.addr %s1237, 2
      %s1239 = smul.addr %s1235, 2
      %s1240 = sadd.s32 %s1238, %s1239
      %s1241 = smul.addr %s1240, 8
      %s1242 = scalar_lea.vmem %s7, %s1241
      // Predicated region
      $region49: #{double_conv_pallas.1} parent=47 // pred_check
        %p1243 = pneg %p204
      $region50: #{double_conv_pallas.1} parent=47 // pred_check_branch
        %1245 = sbr.rel (%p1243) target = $region52
      $region51: #{double_conv_pallas.1} parent=47 // pred_region
        _
      $region52: #{double_conv_pallas.1} parent=47 // pred_fallthru
        _
    $region48: #{double_conv_pallas.1} parent=5 // pred_fallthru
      _
    %p1246 = scmp.le.s32.totalorder 2, %s13
    // Predicated region
    $region53: #{double_conv_pallas.1} parent=5 // pred_check
      %p1247 = pneg %p1246
    $region54: #{double_conv_pallas.1} parent=5 // pred_check_branch
      %1249 = sbr.rel (%p1247) target = $region56
    $region55: #{double_conv_pallas.1} parent=5 // pred_region
      %s1250 = ssub.s32 %s13, 2
      // Predicated region
      $region57: #{double_conv_pallas.1} parent=55 // pred_check
        %p1251 = pneg %p210
      $region58: #{double_conv_pallas.1} parent=55 // pred_check_branch
        %1253 = sbr.rel (%p1251) target = $region60
      $region59: #{double_conv_pallas.1} parent=55 // pred_region
        %p1254 = scmp.lt.s32.totalorder %s24, 1
        %s1255 = scalar_select %p1254, %s24, 1
        %p1256 = scmp.lt.s32.totalorder %s25, 0
        %s1257 = scalar_select %p1256, %s25, 0
        %s1258 = smul.addr %s1257, 2
        %s1259 = smul.addr %s1255, 2
        %s1260 = sadd.s32 %s1258, %s1259
        %s1261 = smul.addr %s1260, 8
        %s1262 = scalar_lea.vmem %s7, %s1261
      $region60: #{double_conv_pallas.1} parent=55 // pred_fallthru
        _
    $region56: #{double_conv_pallas.1} parent=5 // pred_fallthru
      _
  $region6: #{double_conv_pallas.1} parent=0 // loop_footer
    %s17 = sadd.s32 1, %s13
  $region7: #{double_conv_pallas.1} parent=0 // loop_footer_branch
    %12 = sbr.rel target = $region3
  $region8: #{double_conv_pallas.1} parent=0 // loop_exit
    _

</llo_original>
